<compile_context>
chip_gen: v7x
topology: tpu7x:2x2x1
jax: 0.10.0
libtpu: 0.0.40
codegen_flags: <defaults>
</compile_context>

<pallas_src>
import functools

import jax
import jax.numpy as jnp
from jax.experimental import pallas as pl
from jax.experimental.pallas import tpu as pltpu


# --------------------------------------------------------------------------
# Kernel 1: hoisted input projection  pre = x_flat @ W_ih_t + b
# --------------------------------------------------------------------------
def _input_proj_kernel(x_ref, w_ref, b_ref, out_ref):
    # x_ref: (tm, Dp) compute_dtype, w_ref: (Dp, 4Hp) compute_dtype,
    # b_ref: (1, 4Hp) f32, out_ref: (tm, 4Hp) f32
    out_ref[...] = (
        jnp.dot(x_ref[...], w_ref[...], preferred_element_type=jnp.float32)
        + b_ref[...]
    )


# --------------------------------------------------------------------------
# Kernel 2: serial LSTM recurrence over time chunks + final Linear
# --------------------------------------------------------------------------
def _recurrence_kernel(pre_ref, w_hh_ref, w_fc_ref, b_fc_ref, out_ref,
                       h_ref, c_ref, *, seq_len, t_chunk):
    # pre_ref : (b_tile, t_chunk, 4Hp) f32   pre-computed input gates
    # w_hh_ref: (Hp, 4Hp)                    hidden->gates weight (transposed)
    # w_fc_ref: (Hp, OUTp)                   fc weight (transposed, padded)
    # b_fc_ref: (1, OUTp) f32
    # out_ref : (b_tile, OUTp) f32           logits (lane-dense, padded)
    # h_ref/c_ref: (b_tile, Hp) f32 scratch  carried across time chunks
    ti = pl.program_id(1)

    @pl.when(ti == 0)
    def _init():
        h_ref[...] = jnp.zeros_like(h_ref)
        c_ref[...] = jnp.zeros_like(c_ref)

    hp = w_hh_ref.shape[0]
    h = h_ref[...]
    c = c_ref[...]

    # Only the last chunk can contain padded time steps.
    mask_needed = (seq_len % t_chunk) != 0

    # Fully unrolled recurrence (static trip count) — per step only the
    # h @ W_hh matmul + elementwise gate math; the x projection and bias add
    # were hoisted into kernel 1.
    for t in range(t_chunk):
        gates = pre_ref[:, t, :] + jnp.dot(
            h.astype(w_hh_ref.dtype), w_hh_ref[...],
            preferred_element_type=jnp.float32)            # (b_tile, 4Hp) f32
        # 128-lane-aligned gate slices (Hp is a multiple of 128).
        i_g = jax.nn.sigmoid(gates[:, 0 * hp:1 * hp])
        f_g = jax.nn.sigmoid(gates[:, 1 * hp:2 * hp])
        g_g = jnp.tanh(gates[:, 2 * hp:3 * hp])
        o_g = jax.nn.sigmoid(gates[:, 3 * hp:4 * hp])
        c_new = f_g * c + i_g * g_g
        h_new = o_g * jnp.tanh(c_new)
        if mask_needed:
            valid = (ti * t_chunk + t) < seq_len            # skip padded steps
            h = jnp.where(valid, h_new, h)
            c = jnp.where(valid, c_new, c)
        else:
            h, c = h_new, c_new

    h_ref[...] = h
    c_ref[...] = c

    @pl.when(ti == pl.num_programs(1) - 1)
    def _final():
        out_ref[...] = (
            jnp.dot(h.astype(w_fc_ref.dtype), w_fc_ref[...],
                    preferred_element_type=jnp.float32)
            + b_fc_ref[...]
        )


# --------------------------------------------------------------------------
# Wrapper: layout / padding plumbing + the two pallas_calls
# --------------------------------------------------------------------------
def _round_up(n, m):
    return ((n + m - 1) // m) * m


def _pad_gate_blocks(w, h, hp):
    """Pad the trailing 4*h axis ([i,f,g,o] blocks, PyTorch order) so each
    gate block starts at a 128-lane-aligned offset k*hp."""
    lead = w.shape[:-1]
    w4 = w.reshape(*lead, 4, h)
    pad = [(0, 0)] * (w4.ndim - 1) + [(0, hp - h)]
    return jnp.pad(w4, pad).reshape(*lead, 4 * hp)


def lstm_classifier_forward(x, w_ih, w_hh, b_ih, b_hh, w_fc, b_fc, *,
                            b_tile=8, t_chunk=8,
                            compute_dtype=jnp.bfloat16):
    """x: (B, T, D_in) batch-first, like the PyTorch module. Returns (B, out_dim).

    compute_dtype: dtype of the MXU operands (bf16 = fast path on v6e/v7x).
    Accumulation, cell/hidden state and gate math always stay in float32.
    """
    assert b_tile % 8 == 0 and t_chunk % 8 == 0
    B, T, D_in = x.shape
    H = w_hh.shape[1]
    out_dim = w_fc.shape[0]

    Hp = _round_up(H, 128)        # gate-slice / lane alignment
    Dp = _round_up(D_in, 128)
    OUTp = _round_up(out_dim, 128)  # lane-dense final store
    Bp = _round_up(B, b_tile)
    Tp = _round_up(T, t_chunk)

    # ---- input: keep batch-first (no HBM transpose); zero-pad B/T/D.
    xp = jnp.zeros((Bp, Tp, Dp), jnp.float32)
    xp = xp.at[:B, :T, :D_in].set(x.astype(jnp.float32)).astype(compute_dtype)

    # ---- weights: transpose so matmuls are lane-dense, pad per-gate to Hp.
    w_ih_t = _pad_gate_blocks(jnp.transpose(w_ih).astype(jnp.float32), H, Hp)
    w_ih_t = jnp.pad(w_ih_t, ((0, Dp - D_in), (0, 0))).astype(compute_dtype)
    w_hh_t = _pad_gate_blocks(jnp.transpose(w_hh).astype(jnp.float32), H, Hp)
    w_hh_t = jnp.pad(w_hh_t, ((0, Hp - H), (0, 0))).astype(compute_dtype)
    b = _pad_gate_blocks((b_ih + b_hh).reshape(1, 4 * H).astype(jnp.float32),
                         H, Hp)                                      # (1, 4Hp) f32
    w_fc_t = jnp.pad(jnp.transpose(w_fc).astype(jnp.float32),
                     ((0, Hp - H), (0, OUTp - out_dim))).astype(compute_dtype)
    b_fc_p = jnp.pad(b_fc.reshape(1, out_dim).astype(jnp.float32),
                     ((0, 0), (0, OUTp - out_dim)))                  # (1, OUTp) f32

    # Kernels were budgeted for v7x's smaller VMEM (64 MiB physical / 32 MiB
    # default scoped); the footprint here is only a few MiB.
    vmem_limit = 32 * 1024 * 1024

    # ---- 1) hoisted input projection: one big MXU matmul over all (B*T) rows.
    M = Bp * Tp
    x2d = xp.reshape(M, Dp)                      # free metadata reshape in XLA
    tm = next(c for c in (512, 256, 128, 64) if M % c == 0)
    # TODO(synk): tile the K (Dp) axis too if input_dim grows past a few K.
    pre2d = pl.pallas_call(
        _input_proj_kernel,
        out_shape=jax.ShapeDtypeStruct((M, 4 * Hp), jnp.float32),
        grid=(M // tm,),
        in_specs=[
            pl.BlockSpec((tm, Dp), lambda i: (i, 0)),
            pl.BlockSpec((Dp, 4 * Hp), lambda i: (0, 0)),
            pl.BlockSpec((1, 4 * Hp), lambda i: (0, 0)),
        ],
        out_specs=pl.BlockSpec((tm, 4 * Hp), lambda i: (i, 0)),
        compiler_params=pltpu.CompilerParams(
            dimension_semantics=("parallel",),
            vmem_limit_bytes=vmem_limit),
    )(x2d, w_ih_t, b)
    pre = pre2d.reshape(Bp, Tp, 4 * Hp)

    # ---- 2) recurrence: grid = (batch tiles "parallel", time chunks "arbitrary").
    kernel = functools.partial(_recurrence_kernel, seq_len=T, t_chunk=t_chunk)
    out = pl.pallas_call(
        kernel,
        out_shape=jax.ShapeDtypeStruct((Bp, OUTp), jnp.float32),
        grid=(Bp // b_tile, Tp // t_chunk),
        in_specs=[
            pl.BlockSpec((b_tile, t_chunk, 4 * Hp), lambda bi, ti: (bi, ti, 0)),
            pl.BlockSpec((Hp, 4 * Hp), lambda bi, ti: (0, 0)),
            pl.BlockSpec((Hp, OUTp), lambda bi, ti: (0, 0)),
            pl.BlockSpec((1, OUTp), lambda bi, ti: (0, 0)),
        ],
        out_specs=pl.BlockSpec((b_tile, OUTp), lambda bi, ti: (bi, 0)),
        scratch_shapes=[
            pltpu.VMEM((b_tile, Hp), jnp.float32),   # h carry
            pltpu.VMEM((b_tile, Hp), jnp.float32),   # c carry
        ],
        compiler_params=pltpu.CompilerParams(
            dimension_semantics=("parallel", "arbitrary"),
            vmem_limit_bytes=vmem_limit),
    )(pre, w_hh_t, w_fc_t, b_fc_p)

    return out[:B, :out_dim]


# --------------------------------------------------------------------------
# Pure-JAX reference mirroring torch.nn.LSTM + Linear semantics
# --------------------------------------------------------------------------
def _reference_forward(x, w_ih, w_hh, b_ih, b_hh, w_fc, b_fc):
    B, T, _ = x.shape
    H = w_hh.shape[1]
    h = jnp.zeros((B, H), jnp.float32)
    c = jnp.zeros((B, H), jnp.float32)
    for t in range(T):
        gates = x[:, t, :] @ w_ih.T + b_ih + h @ w_hh.T + b_hh
        i = jax.nn.sigmoid(gates[:, 0 * H:1 * H])
        f = jax.nn.sigmoid(gates[:, 1 * H:2 * H])
        g = jnp.tanh(gates[:, 2 * H:3 * H])
        o = jax.nn.sigmoid(gates[:, 3 * H:4 * H])
        c = f * c + i * g
        h = o * jnp.tanh(c)
    return h @ w_fc.T + b_fc


if __name__ == "__main__":
    # Module's own dims (input_dim=300, hidden_dim=128, output_dim=3),
    # small batch/sequence.
    B, T = 2, 8
    input_dim, hidden_dim, output_dim = 300, 128, 3

    key = jax.random.PRNGKey(0)
    ks = jax.random.split(key, 7)
    scale = 1.0 / (hidden_dim ** 0.5)

    x = jax.random.normal(ks[0], (B, T, input_dim), jnp.float32)
    w_ih = jax.random.uniform(ks[1], (4 * hidden_dim, input_dim), jnp.float32,
                              -scale, scale)
    w_hh = jax.random.uniform(ks[2], (4 * hidden_dim, hidden_dim), jnp.float32,
                              -scale, scale)
    b_ih = jax.random.uniform(ks[3], (4 * hidden_dim,), jnp.float32, -scale, scale)
    b_hh = jax.random.uniform(ks[4], (4 * hidden_dim,), jnp.float32, -scale, scale)
    w_fc = jax.random.uniform(ks[5], (output_dim, hidden_dim), jnp.float32,
                              -scale, scale)
    b_fc = jax.random.uniform(ks[6], (output_dim,), jnp.float32, -scale, scale)

    ref = _reference_forward(x, w_ih, w_hh, b_ih, b_hh, w_fc, b_fc)

    # f32 path: exact semantics check.
    out_f32 = lstm_classifier_forward(x, w_ih, w_hh, b_ih, b_hh, w_fc, b_fc,
                                      compute_dtype=jnp.float32)
    out_f32 = jax.block_until_ready(out_f32)
    assert out_f32.shape == (B, output_dim)
    assert jnp.allclose(out_f32, ref, atol=1e-4, rtol=1e-4), (out_f32, ref)

    # bf16 MXU-operand fast path (v6e/v7x); f32 state/accumulation inside.
    out_bf16 = lstm_classifier_forward(x, w_ih, w_hh, b_ih, b_hh, w_fc, b_fc,
                                       compute_dtype=jnp.bfloat16)
    out_bf16 = jax.block_until_ready(out_bf16)
    assert out_bf16.shape == (B, output_dim)
    assert jnp.allclose(out_bf16, ref, atol=5e-2, rtol=5e-2), (out_bf16, ref)

    print("KERNEL_OK")
</pallas_src>

<mosaic_0001>
module attributes {stable_mosaic.version = 11 : i64} {
  func.func @_input_proj_kernel(%arg0: i32, %arg1: memref<64x384xf32, #tpu.memory_space<vmem>>, %arg2: memref<384x512xf32, #tpu.memory_space<vmem>>, %arg3: memref<1x512xf32, #tpu.memory_space<vmem>>, %arg4: memref<64x512xf32, #tpu.memory_space<vmem>>) attributes {dimension_semantics = [#tpu.dimension_semantics<parallel>], iteration_bounds = array<i64: 1>, scalar_prefetch = 0 : i64, scratch_operands = 0 : i64, tpu.core_type = #tpu.core_type<tc>, window_params = [{transform_indices = @transform_0, window_bounds = array<i64: 64, 384>}, {pipeline_mode = #tpu.pipeline_mode<synchronous>, transform_indices = @transform_1, window_bounds = array<i64: 384, 512>}, {pipeline_mode = #tpu.pipeline_mode<synchronous>, transform_indices = @transform_2, window_bounds = array<i64: 1, 512>}, {transform_indices = @transform_3, window_bounds = array<i64: 64, 512>}]} {
    %c0 = arith.constant 0 : index
    %c0_0 = arith.constant 0 : index
    %0 = vector.load %arg1[%c0, %c0_0] : memref<64x384xf32, #tpu.memory_space<vmem>>, vector<64x384xf32>
    %c0_1 = arith.constant 0 : index
    %c0_2 = arith.constant 0 : index
    %1 = vector.load %arg2[%c0_1, %c0_2] : memref<384x512xf32, #tpu.memory_space<vmem>>, vector<384x512xf32>
    %cst = arith.constant dense<0.000000e+00> : vector<64x512xf32>
    %2 = tpu.matmul %0, %1, %cst {dimension_numbers = #tpu.dot_dimension_numbers<[1], [0], [0], [1], [0, 0, 1, 1], [], []>} : vector<64x384xf32>, vector<384x512xf32>, vector<64x512xf32> -> vector<64x512xf32>
    %c0_3 = arith.constant 0 : index
    %c0_4 = arith.constant 0 : index
    %3 = vector.load %arg3[%c0_3, %c0_4] : memref<1x512xf32, #tpu.memory_space<vmem>>, vector<1x512xf32>
    %4 = vector.broadcast %3 : vector<1x512xf32> to vector<64x512xf32>
    %5 = arith.addf %2, %4 : vector<64x512xf32>
    %c0_5 = arith.constant 0 : index
    %c0_6 = arith.constant 0 : index
    %6 = vector.load %arg4[%c0_5, %c0_6] : memref<64x512xf32, #tpu.memory_space<vmem>>, vector<64x512xf32>
    tpu.vector_store %arg4[%c0_5, %c0_6], %5 {strides = array<i32>} : memref<64x512xf32, #tpu.memory_space<vmem>>, vector<64x512xf32>,
    return
  }
  func.func @transform_0(%arg0: i32) -> (i32, i32) {
    %c0_i32 = arith.constant 0 : i32
    %c0_i32_0 = arith.constant 0 : i32
    return %arg0, %c0_i32 : i32, i32
  }
  func.func @transform_1(%arg0: i32) -> (i32, i32) {
    %c0_i32 = arith.constant 0 : i32
    %c0_i32_0 = arith.constant 0 : i32
    %c0_i32_1 = arith.constant 0 : i32
    return %c0_i32, %c0_i32_0 : i32, i32
  }
  func.func @transform_2(%arg0: i32) -> (i32, i32) {
    %c0_i32 = arith.constant 0 : i32
    %c0_i32_0 = arith.constant 0 : i32
    %c0_i32_1 = arith.constant 0 : i32
    return %c0_i32, %c0_i32_0 : i32, i32
  }
  func.func @transform_3(%arg0: i32) -> (i32, i32) {
    %c0_i32 = arith.constant 0 : i32
    %c0_i32_0 = arith.constant 0 : i32
    return %arg0, %c0_i32 : i32, i32
  }
}

</mosaic_0001>

<llo_original>
// kernel: tpu_custom_call.1
$region0: #{tpu_custom_call.1}
  #allocation0 [shape = 'u32[]', space=smem, size = 0x4, offset = 0x4, fixed_abs, tag = 'smem constant byte address 0x4 - core index']
  #allocation1 [shape = 'u32[144,128]{1,0:T(1,128)}', space=vmem, size = 0x12000, scoped, tag = 'internal scratch']
  %s0 = inlined_call_operand.hbm [shape: f32[64,384], index: 0, kind: input, shape index: {}]
  %s1 = inlined_call_operand.hbm [shape: f32[384,512], index: 1, kind: input, shape index: {}]
  %s2 = inlined_call_operand.vmem [shape: f32[1,512], index: 2, kind: input, shape index: {}]
  %s3 = inlined_call_operand.hbm [shape: f32[64,512], index: 3, kind: output, shape index: {}]
  %s4 = sld [smem:[#allocation0]]
  $region30: #{tpu_custom_call.1} parent=0
    _
  %s6 = ssub.s32 1, %s4
  %s7 = scalar_select 0, %s6, %s4
  $region1: #{tpu_custom_call.1} parent=0
    #allocation2 [shape = 'u8[98304]{0}', space=vmem, size = 0x18000, scoped, tag = 'input window, operand 0, single buffered']
    #allocation3 [shape = 's32[1]{0}', space=sflag, size = 0x4, scoped, tag = 'scoped memory for tpu_custom_call.1']
    #allocation4 [shape = 's32[1]{0}', space=sflag, size = 0x4, scoped, tag = 'scoped memory for tpu_custom_call.1']
    #allocation5 [shape = 'u8[786432]{0}', space=vmem, size = 0xc0000, scoped, tag = 'input window, operand 1, single buffered']
    #allocation6 [shape = 's32[1]{0}', space=sflag, size = 0x4, scoped, tag = 'scoped memory for tpu_custom_call.1']
    #allocation7 [shape = 'u8[131072]{0}', space=vmem, size = 0x20000, scoped, tag = 'output window, operand 0, single buffered']
    %8 = vsyncpa [#allocation3], 0
    %9 = vsyncpa [#allocation6], 0
    %10 = vsyncpa [#allocation4], 0
    // Predicated region
    $region2: #{tpu_custom_call.1} parent=1 // pred_check
      _
    $region3: #{tpu_custom_call.1} parent=1 // pred_check_branch
      %12 = sbr.rel (0) target = $region5
    $region4: #{tpu_custom_call.1} parent=1 // pred_region
      %s14 = ssub.s32 3072, 3072
      %15 = vsyncadd [#allocation3], %s14
      %s16 = sshll.u32 [#allocation2], 4
      %s17 = int_to_ptr.vmem [resolvable:$true] %s16
      %22 = dma.hbm_to_vmem [thread:$0]  %s0, 3072, %s17, [#allocation3], 384, 384, 24
    $region5: #{tpu_custom_call.1} parent=1 // pred_fallthru
      _
    // Predicated region
    $region6: #{tpu_custom_call.1} parent=1 // pred_check
      _
    $region7: #{tpu_custom_call.1} parent=1 // pred_check_branch
      %24 = sbr.rel (0) target = $region9
    $region8: #{tpu_custom_call.1} parent=1 // pred_region
      %s26 = ssub.s32 24576, 24576
      %27 = vsyncadd [#allocation6], %s26
      %s28 = sshll.u32 [#allocation5], 4
      %s29 = int_to_ptr.vmem [resolvable:$true] %s28
      %34 = dma.hbm_to_vmem [thread:$0]  %s1, 24576, %s29, [#allocation6], 512, 512, 32
    $region9: #{tpu_custom_call.1} parent=1 // pred_fallthru
      _
    // Predicated region
    $region10: #{tpu_custom_call.1} parent=1 // pred_check
      _
    $region11: #{tpu_custom_call.1} parent=1 // pred_check_branch
      %36 = sbr.rel (0) target = $region13
    $region12: #{tpu_custom_call.1} parent=1 // pred_region
      _
    $region13: #{tpu_custom_call.1} parent=1 // pred_fallthru
      _
    // Predicated region
    $region14: #{tpu_custom_call.1} parent=1 // pred_check
      _
    $region15: #{tpu_custom_call.1} parent=1 // pred_check_branch
      %38 = sbr.rel (0) target = $region17
    $region16: #{tpu_custom_call.1} parent=1 // pred_region
      %39 = dma.done [#allocation3], 3072
    $region17: #{tpu_custom_call.1} parent=1 // pred_fallthru
      _
    // Predicated region
    $region18: #{tpu_custom_call.1} parent=1 // pred_check
      _
    $region19: #{tpu_custom_call.1} parent=1 // pred_check_branch
      %41 = sbr.rel (0) target = $region21
    $region20: #{tpu_custom_call.1} parent=1 // pred_region
      %42 = dma.done [#allocation6], 24576
    $region21: #{tpu_custom_call.1} parent=1 // pred_fallthru
      _
    %v43 = vld [vmem:[#allocation2] sm:$0xff]
    %v44 = vld [vmem:[#allocation2 + $0x8] sm:$0xff]
    %v45 = vld [vmem:[#allocation2 + $0x10] sm:$0xff]
    %v46 = vld [vmem:[#allocation2 + $0x18] sm:$0xff]
    %v47 = vld [vmem:[#allocation2 + $0x20] sm:$0xff]
    %v48 = vld [vmem:[#allocation2 + $0x28] sm:$0xff]
    %v49 = vld [vmem:[#allocation2 + $0x30] sm:$0xff]
    %v50 = vld [vmem:[#allocation2 + $0x38] sm:$0xff]
    %v51 = vld [vmem:[#allocation2 + $0x40] sm:$0xff]
    %v52 = vld [vmem:[#allocation2 + $0x48] sm:$0xff]
    %v53 = vld [vmem:[#allocation2 + $0x50] sm:$0xff]
    %v54 = vld [vmem:[#allocation2 + $0x58] sm:$0xff]
    %v55 = vld [vmem:[#allocation2 + $0x60] sm:$0xff]
    %v56 = vld [vmem:[#allocation2 + $0x68] sm:$0xff]
    %v57 = vld [vmem:[#allocation2 + $0x70] sm:$0xff]
    %v58 = vld [vmem:[#allocation2 + $0x78] sm:$0xff]
    %v59 = vld [vmem:[#allocation2 + $0x80] sm:$0xff]
    %v60 = vld [vmem:[#allocation2 + $0x88] sm:$0xff]
    %v61 = vld [vmem:[#allocation2 + $0x90] sm:$0xff]
    %v62 = vld [vmem:[#allocation2 + $0x98] sm:$0xff]
    %v63 = vld [vmem:[#allocation2 + $0xa0] sm:$0xff]
    %v64 = vld [vmem:[#allocation2 + $0xa8] sm:$0xff]
    %v65 = vld [vmem:[#allocation2 + $0xb0] sm:$0xff]
    %v66 = vld [vmem:[#allocation2 + $0xb8] sm:$0xff]
    %v67 = vld [vmem:[#allocation5] sm:$0xff]
    %v68 = vld [vmem:[#allocation5 + $0x8] sm:$0xff]
    %v69 = vld [vmem:[#allocation5 + $0x10] sm:$0xff]
    %v70 = vld [vmem:[#allocation5 + $0x18] sm:$0xff]
    %v71 = vld [vmem:[#allocation5 + $0x20] sm:$0xff]
    %v72 = vld [vmem:[#allocation5 + $0x28] sm:$0xff]
    %v73 = vld [vmem:[#allocation5 + $0x30] sm:$0xff]
    %v74 = vld [vmem:[#allocation5 + $0x38] sm:$0xff]
    %v75 = vld [vmem:[#allocation5 + $0x40] sm:$0xff]
    %v76 = vld [vmem:[#allocation5 + $0x48] sm:$0xff]
    %v77 = vld [vmem:[#allocation5 + $0x50] sm:$0xff]
    %v78 = vld [vmem:[#allocation5 + $0x58] sm:$0xff]
    %v79 = vld [vmem:[#allocation5 + $0x60] sm:$0xff]
    %v80 = vld [vmem:[#allocation5 + $0x68] sm:$0xff]
    %v81 = vld [vmem:[#allocation5 + $0x70] sm:$0xff]
    %v82 = vld [vmem:[#allocation5 + $0x78] sm:$0xff]
    %v83 = vld [vmem:[#allocation5 + $0x80] sm:$0xff]
    %v84 = vld [vmem:[#allocation5 + $0x88] sm:$0xff]
    %v85 = vld [vmem:[#allocation5 + $0x90] sm:$0xff]
    %v86 = vld [vmem:[#allocation5 + $0x98] sm:$0xff]
    %v87 = vld [vmem:[#allocation5 + $0xa0] sm:$0xff]
    %v88 = vld [vmem:[#allocation5 + $0xa8] sm:$0xff]
    %v89 = vld [vmem:[#allocation5 + $0xb0] sm:$0xff]
    %v90 = vld [vmem:[#allocation5 + $0xb8] sm:$0xff]
    %v91 = vld [vmem:[#allocation5 + $0xc0] sm:$0xff]
    %v92 = vld [vmem:[#allocation5 + $0xc8] sm:$0xff]
    %v93 = vld [vmem:[#allocation5 + $0xd0] sm:$0xff]
    %v94 = vld [vmem:[#allocation5 + $0xd8] sm:$0xff]
    %v95 = vld [vmem:[#allocation5 + $0xe0] sm:$0xff]
    %v96 = vld [vmem:[#allocation5 + $0xe8] sm:$0xff]
    %v97 = vld [vmem:[#allocation5 + $0xf0] sm:$0xff]
    %v98 = vld [vmem:[#allocation5 + $0xf8] sm:$0xff]
    %v99 = vld [vmem:[#allocation5 + $0x100] sm:$0xff]
    %v100 = vld [vmem:[#allocation5 + $0x108] sm:$0xff]
    %v101 = vld [vmem:[#allocation5 + $0x110] sm:$0xff]
    %v102 = vld [vmem:[#allocation5 + $0x118] sm:$0xff]
    %v103 = vld [vmem:[#allocation5 + $0x120] sm:$0xff]
    %v104 = vld [vmem:[#allocation5 + $0x128] sm:$0xff]
    %v105 = vld [vmem:[#allocation5 + $0x130] sm:$0xff]
    %v106 = vld [vmem:[#allocation5 + $0x138] sm:$0xff]
    %v107 = vld [vmem:[#allocation5 + $0x140] sm:$0xff]
    %v108 = vld [vmem:[#allocation5 + $0x148] sm:$0xff]
    %v109 = vld [vmem:[#allocation5 + $0x150] sm:$0xff]
    %v110 = vld [vmem:[#allocation5 + $0x158] sm:$0xff]
    %v111 = vld [vmem:[#allocation5 + $0x160] sm:$0xff]
    %v112 = vld [vmem:[#allocation5 + $0x168] sm:$0xff]
    %v113 = vld [vmem:[#allocation5 + $0x170] sm:$0xff]
    %v114 = vld [vmem:[#allocation5 + $0x178] sm:$0xff]
    %v115 = vld [vmem:[#allocation5 + $0x180] sm:$0xff]
    %v116 = vld [vmem:[#allocation5 + $0x188] sm:$0xff]
    %v117 = vld [vmem:[#allocation5 + $0x190] sm:$0xff]
    %v118 = vld [vmem:[#allocation5 + $0x198] sm:$0xff]
    %v119 = vld [vmem:[#allocation5 + $0x1a0] sm:$0xff]
    %v120 = vld [vmem:[#allocation5 + $0x1a8] sm:$0xff]
    %v121 = vld [vmem:[#allocation5 + $0x1b0] sm:$0xff]
    %v122 = vld [vmem:[#allocation5 + $0x1b8] sm:$0xff]
    %v123 = vld [vmem:[#allocation5 + $0x1c0] sm:$0xff]
    %v124 = vld [vmem:[#allocation5 + $0x1c8] sm:$0xff]
    %v125 = vld [vmem:[#allocation5 + $0x1d0] sm:$0xff]
    %v126 = vld [vmem:[#allocation5 + $0x1d8] sm:$0xff]
    %v127 = vld [vmem:[#allocation5 + $0x1e0] sm:$0xff]
    %v128 = vld [vmem:[#allocation5 + $0x1e8] sm:$0xff]
    %v129 = vld [vmem:[#allocation5 + $0x1f0] sm:$0xff]
    %v130 = vld [vmem:[#allocation5 + $0x1f8] sm:$0xff]
    %v131 = vld [vmem:[#allocation5 + $0x200] sm:$0xff]
    %v132 = vld [vmem:[#allocation5 + $0x208] sm:$0xff]
    %v133 = vld [vmem:[#allocation5 + $0x210] sm:$0xff]
    %v134 = vld [vmem:[#allocation5 + $0x218] sm:$0xff]
    %v135 = vld [vmem:[#allocation5 + $0x220] sm:$0xff]
    %v136 = vld [vmem:[#allocation5 + $0x228] sm:$0xff]
    %v137 = vld [vmem:[#allocation5 + $0x230] sm:$0xff]
    %v138 = vld [vmem:[#allocation5 + $0x238] sm:$0xff]
    %v139 = vld [vmem:[#allocation5 + $0x240] sm:$0xff]
    %v140 = vld [vmem:[#allocation5 + $0x248] sm:$0xff]
    %v141 = vld [vmem:[#allocation5 + $0x250] sm:$0xff]
    %v142 = vld [vmem:[#allocation5 + $0x258] sm:$0xff]
    %v143 = vld [vmem:[#allocation5 + $0x260] sm:$0xff]
    %v144 = vld [vmem:[#allocation5 + $0x268] sm:$0xff]
    %v145 = vld [vmem:[#allocation5 + $0x270] sm:$0xff]
    %v146 = vld [vmem:[#allocation5 + $0x278] sm:$0xff]
    %v147 = vld [vmem:[#allocation5 + $0x280] sm:$0xff]
    %v148 = vld [vmem:[#allocation5 + $0x288] sm:$0xff]
    %v149 = vld [vmem:[#allocation5 + $0x290] sm:$0xff]
    %v150 = vld [vmem:[#allocation5 + $0x298] sm:$0xff]
    %v151 = vld [vmem:[#allocation5 + $0x2a0] sm:$0xff]
    %v152 = vld [vmem:[#allocation5 + $0x2a8] sm:$0xff]
    %v153 = vld [vmem:[#allocation5 + $0x2b0] sm:$0xff]
    %v154 = vld [vmem:[#allocation5 + $0x2b8] sm:$0xff]
    %v155 = vld [vmem:[#allocation5 + $0x2c0] sm:$0xff]
    %v156 = vld [vmem:[#allocation5 + $0x2c8] sm:$0xff]
    %v157 = vld [vmem:[#allocation5 + $0x2d0] sm:$0xff]
    %v158 = vld [vmem:[#allocation5 + $0x2d8] sm:$0xff]
    %v159 = vld [vmem:[#allocation5 + $0x2e0] sm:$0xff]
    %v160 = vld [vmem:[#allocation5 + $0x2e8] sm:$0xff]
    %v161 = vld [vmem:[#allocation5 + $0x2f0] sm:$0xff]
    %v162 = vld [vmem:[#allocation5 + $0x2f8] sm:$0xff]
    %v163 = vld [vmem:[#allocation5 + $0x300] sm:$0xff]
    %v164 = vld [vmem:[#allocation5 + $0x308] sm:$0xff]
    %v165 = vld [vmem:[#allocation5 + $0x310] sm:$0xff]
    %v166 = vld [vmem:[#allocation5 + $0x318] sm:$0xff]
    %v167 = vld [vmem:[#allocation5 + $0x320] sm:$0xff]
    %v168 = vld [vmem:[#allocation5 + $0x328] sm:$0xff]
    %v169 = vld [vmem:[#allocation5 + $0x330] sm:$0xff]
    %v170 = vld [vmem:[#allocation5 + $0x338] sm:$0xff]
    %v171 = vld [vmem:[#allocation5 + $0x340] sm:$0xff]
    %v172 = vld [vmem:[#allocation5 + $0x348] sm:$0xff]
    %v173 = vld [vmem:[#allocation5 + $0x350] sm:$0xff]
    %v174 = vld [vmem:[#allocation5 + $0x358] sm:$0xff]
    %v175 = vld [vmem:[#allocation5 + $0x360] sm:$0xff]
    %v176 = vld [vmem:[#allocation5 + $0x368] sm:$0xff]
    %v177 = vld [vmem:[#allocation5 + $0x370] sm:$0xff]
    %v178 = vld [vmem:[#allocation5 + $0x378] sm:$0xff]
    %v179 = vld [vmem:[#allocation5 + $0x380] sm:$0xff]
    %v180 = vld [vmem:[#allocation5 + $0x388] sm:$0xff]
    %v181 = vld [vmem:[#allocation5 + $0x390] sm:$0xff]
    %v182 = vld [vmem:[#allocation5 + $0x398] sm:$0xff]
    %v183 = vld [vmem:[#allocation5 + $0x3a0] sm:$0xff]
    %v184 = vld [vmem:[#allocation5 + $0x3a8] sm:$0xff]
    %v185 = vld [vmem:[#allocation5 + $0x3b0] sm:$0xff]
    %v186 = vld [vmem:[#allocation5 + $0x3b8] sm:$0xff]
    %v187 = vld [vmem:[#allocation5 + $0x3c0] sm:$0xff]
    %v188 = vld [vmem:[#allocation5 + $0x3c8] sm:$0xff]
    %v189 = vld [vmem:[#allocation5 + $0x3d0] sm:$0xff]
    %v190 = vld [vmem:[#allocation5 + $0x3d8] sm:$0xff]
    %v191 = vld [vmem:[#allocation5 + $0x3e0] sm:$0xff]
    %v192 = vld [vmem:[#allocation5 + $0x3e8] sm:$0xff]
    %v193 = vld [vmem:[#allocation5 + $0x3f0] sm:$0xff]
    %v194 = vld [vmem:[#allocation5 + $0x3f8] sm:$0xff]
    %v195 = vld [vmem:[#allocation5 + $0x400] sm:$0xff]
    %v196 = vld [vmem:[#allocation5 + $0x408] sm:$0xff]
    %v197 = vld [vmem:[#allocation5 + $0x410] sm:$0xff]
    %v198 = vld [vmem:[#allocation5 + $0x418] sm:$0xff]
    %v199 = vld [vmem:[#allocation5 + $0x420] sm:$0xff]
    %v200 = vld [vmem:[#allocation5 + $0x428] sm:$0xff]
    %v201 = vld [vmem:[#allocation5 + $0x430] sm:$0xff]
    %v202 = vld [vmem:[#allocation5 + $0x438] sm:$0xff]
    %v203 = vld [vmem:[#allocation5 + $0x440] sm:$0xff]
    %v204 = vld [vmem:[#allocation5 + $0x448] sm:$0xff]
    %v205 = vld [vmem:[#allocation5 + $0x450] sm:$0xff]
    %v206 = vld [vmem:[#allocation5 + $0x458] sm:$0xff]
    %v207 = vld [vmem:[#allocation5 + $0x460] sm:$0xff]
    %v208 = vld [vmem:[#allocation5 + $0x468] sm:$0xff]
    %v209 = vld [vmem:[#allocation5 + $0x470] sm:$0xff]
    %v210 = vld [vmem:[#allocation5 + $0x478] sm:$0xff]
    %v211 = vld [vmem:[#allocation5 + $0x480] sm:$0xff]
    %v212 = vld [vmem:[#allocation5 + $0x488] sm:$0xff]
    %v213 = vld [vmem:[#allocation5 + $0x490] sm:$0xff]
    %v214 = vld [vmem:[#allocation5 + $0x498] sm:$0xff]
    %v215 = vld [vmem:[#allocation5 + $0x4a0] sm:$0xff]
    %v216 = vld [vmem:[#allocation5 + $0x4a8] sm:$0xff]
    %v217 = vld [vmem:[#allocation5 + $0x4b0] sm:$0xff]
    %v218 = vld [vmem:[#allocation5 + $0x4b8] sm:$0xff]
    %v219 = vld [vmem:[#allocation5 + $0x4c0] sm:$0xff]
    %v220 = vld [vmem:[#allocation5 + $0x4c8] sm:$0xff]
    %v221 = vld [vmem:[#allocation5 + $0x4d0] sm:$0xff]
    %v222 = vld [vmem:[#allocation5 + $0x4d8] sm:$0xff]
    %v223 = vld [vmem:[#allocation5 + $0x4e0] sm:$0xff]
    %v224 = vld [vmem:[#allocation5 + $0x4e8] sm:$0xff]
    %v225 = vld [vmem:[#allocation5 + $0x4f0] sm:$0xff]
    %v226 = vld [vmem:[#allocation5 + $0x4f8] sm:$0xff]
    %v227 = vld [vmem:[#allocation5 + $0x500] sm:$0xff]
    %v228 = vld [vmem:[#allocation5 + $0x508] sm:$0xff]
    %v229 = vld [vmem:[#allocation5 + $0x510] sm:$0xff]
    %v230 = vld [vmem:[#allocation5 + $0x518] sm:$0xff]
    %v231 = vld [vmem:[#allocation5 + $0x520] sm:$0xff]
    %v232 = vld [vmem:[#allocation5 + $0x528] sm:$0xff]
    %v233 = vld [vmem:[#allocation5 + $0x530] sm:$0xff]
    %v234 = vld [vmem:[#allocation5 + $0x538] sm:$0xff]
    %v235 = vld [vmem:[#allocation5 + $0x540] sm:$0xff]
    %v236 = vld [vmem:[#allocation5 + $0x548] sm:$0xff]
    %v237 = vld [vmem:[#allocation5 + $0x550] sm:$0xff]
    %v238 = vld [vmem:[#allocation5 + $0x558] sm:$0xff]
    %v239 = vld [vmem:[#allocation5 + $0x560] sm:$0xff]
    %v240 = vld [vmem:[#allocation5 + $0x568] sm:$0xff]
    %v241 = vld [vmem:[#allocation5 + $0x570] sm:$0xff]
    %v242 = vld [vmem:[#allocation5 + $0x578] sm:$0xff]
    %v243 = vld [vmem:[#allocation5 + $0x580] sm:$0xff]
    %v244 = vld [vmem:[#allocation5 + $0x588] sm:$0xff]
    %v245 = vld [vmem:[#allocation5 + $0x590] sm:$0xff]
    %v246 = vld [vmem:[#allocation5 + $0x598] sm:$0xff]
    %v247 = vld [vmem:[#allocation5 + $0x5a0] sm:$0xff]
    %v248 = vld [vmem:[#allocation5 + $0x5a8] sm:$0xff]
    %v249 = vld [vmem:[#allocation5 + $0x5b0] sm:$0xff]
    %v250 = vld [vmem:[#allocation5 + $0x5b8] sm:$0xff]
    %v251 = vld [vmem:[#allocation5 + $0x5c0] sm:$0xff]
    %v252 = vld [vmem:[#allocation5 + $0x5c8] sm:$0xff]
    %v253 = vld [vmem:[#allocation5 + $0x5d0] sm:$0xff]
    %v254 = vld [vmem:[#allocation5 + $0x5d8] sm:$0xff]
    %v255 = vld [vmem:[#allocation5 + $0x5e0] sm:$0xff]
    %v256 = vld [vmem:[#allocation5 + $0x5e8] sm:$0xff]
    %v257 = vld [vmem:[#allocation5 + $0x5f0] sm:$0xff]
    %v258 = vld [vmem:[#allocation5 + $0x5f8] sm:$0xff]
    %v259 = vld [vmem:[%s2] sm:$0xf]
    %v261 = vlaneseq
    %v262 = vshrl.u32 %v261, 7
    %v263 = vsub.s32 0, %v262
    %v264 = vrot.slane %v259, %v263
    %v265 = vlaneseq
    %v266 = vshrl.u32 %v265, 7
    %v267 = vsub.s32 1, %v266
    %v268 = vrot.slane %v259, %v267
    %v269 = vlaneseq
    %v270 = vshrl.u32 %v269, 7
    %v271 = vsub.s32 2, %v270
    %v272 = vrot.slane %v259, %v271
    %v273 = vlaneseq
    %v274 = vshrl.u32 %v273, 7
    %v275 = vsub.s32 3, %v274
    %v276 = vrot.slane %v259, %v275
    %281 = vmatprep.subr.mxu0 %v68
    %282 = vmatpush1.msra.mxu0 %v67
    %283 = vmatprep.subr.mxu0 %v72
    %284 = vmatpush1.msra.mxu0 %v71
    %285 = vmatprep.subr.mxu0 %v76
    %286 = vmatpush1.msra.mxu0 %v75
    %287 = vmatprep.subr.mxu0 %v80
    %288 = vmatpush1.msra.mxu0 %v79
    %289 = vmatprep.subr.mxu0 %v84
    %290 = vmatpush1.msra.mxu0 %v83
    %291 = vmatprep.subr.mxu0 %v88
    %292 = vmatpush1.msra.mxu0 %v87
    %293 = vmatprep.subr.mxu0 %v92
    %294 = vmatpush1.msra.mxu0 %v91
    %295 = vmatprep.subr.mxu0 %v96
    %296 = vmatpush1.msra.mxu0 %v95
    %297 = vmatprep.subr.mxu0 %v100
    %298 = vmatpush1.msra.mxu0 %v99
    %299 = vmatprep.subr.mxu0 %v104
    %300 = vmatpush1.msra.mxu0 %v103
    %301 = vmatprep.subr.mxu0 %v108
    %302 = vmatpush1.msra.mxu0 %v107
    %303 = vmatprep.subr.mxu0 %v112
    %304 = vmatpush1.msra.mxu0 %v111
    %305 = vmatprep.subr.mxu0 %v116
    %306 = vmatpush1.msra.mxu0 %v115
    %307 = vmatprep.subr.mxu0 %v120
    %308 = vmatpush1.msra.mxu0 %v119
    %309 = vmatprep.subr.mxu0 %v124
    %310 = vmatpush1.msra.mxu0 %v123
    %311 = vmatprep.subr.mxu0 %v128
    %312 = vmatpush1.msra.mxu0 %v127
    %313 = vmatprep.subr.mxu0 %v132
    %314 = vmatpush1.msra.mxu0 %v131
    %315 = vmatprep.subr.mxu0 %v136
    %316 = vmatpush1.msra.mxu0 %v135
    %317 = vmatprep.subr.mxu0 %v140
    %318 = vmatpush1.msra.mxu0 %v139
    %319 = vmatprep.subr.mxu0 %v144
    %320 = vmatpush1.msra.mxu0 %v143
    %321 = vmatprep.subr.mxu0 %v148
    %322 = vmatpush1.msra.mxu0 %v147
    %323 = vmatprep.subr.mxu0 %v152
    %324 = vmatpush1.msra.mxu0 %v151
    %325 = vmatprep.subr.mxu0 %v156
    %326 = vmatpush1.msra.mxu0 %v155
    %327 = vmatprep.subr.mxu0 %v160
    %328 = vmatpush1.msra.mxu0 %v159
    %329 = vmatprep.subr.mxu0 %v164
    %330 = vmatpush1.msra.mxu0 %v163
    %331 = vmatprep.subr.mxu0 %v168
    %332 = vmatpush1.msra.mxu0 %v167
    %333 = vmatprep.subr.mxu0 %v172
    %334 = vmatpush1.msra.mxu0 %v171
    %335 = vmatprep.subr.mxu0 %v176
    %336 = vmatpush1.msra.mxu0 %v175
    %337 = vmatprep.subr.mxu0 %v180
    %338 = vmatpush1.msra.mxu0 %v179
    %339 = vmatprep.subr.mxu0 %v184
    %340 = vmatpush1.msra.mxu0 %v183
    %341 = vmatprep.subr.mxu0 %v188
    %342 = vmatpush1.msra.mxu0 %v187
    %343 = vmatprep.subr.mxu0 %v192
    %344 = vmatpush1.msra.mxu0 %v191
    %345 = vmatprep.mubr.f32.mxu0 %v44
    %346 = vmatmul.mubr.f32.gmra.mrb[0].mxu0 %v43
    %v347 = vpop.f32.mrb[0].mxu0
    %v348 = vadd.f32 %v264, %v347
    %v349 = vpop.f32.mrb[0].mxu0
    %v350 = vadd.f32 %v268, %v349
    %351 = vmatprep.mubr.f32.mxu0 %v47
    %352 = vmatmul.mubr.f32.gmra.mrb[0].mxu0 %v46
    %v353 = vpop.f32.mrb[0].mxu0
    %v354 = vadd.f32 %v264, %v353
    %v355 = vpop.f32.mrb[0].mxu0
    %v356 = vadd.f32 %v268, %v355
    %357 = vmatprep.mubr.f32.mxu0 %v50
    %358 = vmatmul.mubr.f32.gmra.mrb[0].mxu0 %v49
    %v359 = vpop.f32.mrb[0].mxu0
    %v360 = vadd.f32 %v264, %v359
    %v361 = vpop.f32.mrb[0].mxu0
    %v362 = vadd.f32 %v268, %v361
    %363 = vmatprep.mubr.f32.mxu0 %v53
    %364 = vmatmul.mubr.f32.gmra.mrb[0].mxu0 %v52
    %v365 = vpop.f32.mrb[0].mxu0
    %v366 = vadd.f32 %v264, %v365
    %v367 = vpop.f32.mrb[0].mxu0
    %v368 = vadd.f32 %v268, %v367
    %369 = vmatprep.mubr.f32.mxu0 %v56
    %370 = vmatmul.mubr.f32.gmra.mrb[0].mxu0 %v55
    %v371 = vpop.f32.mrb[0].mxu0
    %v372 = vadd.f32 %v264, %v371
    %v373 = vpop.f32.mrb[0].mxu0
    %v374 = vadd.f32 %v268, %v373
    %375 = vmatprep.mubr.f32.mxu0 %v59
    %376 = vmatmul.mubr.f32.gmra.mrb[0].mxu0 %v58
    %v377 = vpop.f32.mrb[0].mxu0
    %v378 = vadd.f32 %v264, %v377
    %v379 = vpop.f32.mrb[0].mxu0
    %v380 = vadd.f32 %v268, %v379
    %381 = vmatprep.mubr.f32.mxu0 %v62
    %382 = vmatmul.mubr.f32.gmra.mrb[0].mxu0 %v61
    %v383 = vpop.f32.mrb[0].mxu0
    %v384 = vadd.f32 %v264, %v383
    %v385 = vpop.f32.mrb[0].mxu0
    %v386 = vadd.f32 %v268, %v385
    %387 = vmatprep.mubr.f32.mxu0 %v65
    %388 = vmatmul.mubr.f32.gmra.mrb[0].mxu0 %v64
    %v389 = vpop.f32.mrb[0].mxu0
    %v390 = vadd.f32 %v264, %v389
    %v391 = vpop.f32.mrb[0].mxu0
    %v392 = vadd.f32 %v268, %v391
    %393 = vdwg.mxu0
    %394 = vmatprep.subr.mxu0 %v196
    %395 = vmatpush1.msra.mxu0 %v195
    %396 = vmatprep.subr.mxu0 %v200
    %397 = vmatpush1.msra.mxu0 %v199
    %398 = vmatprep.subr.mxu0 %v204
    %399 = vmatpush1.msra.mxu0 %v203
    %400 = vmatprep.subr.mxu0 %v208
    %401 = vmatpush1.msra.mxu0 %v207
    %402 = vmatprep.subr.mxu0 %v212
    %403 = vmatpush1.msra.mxu0 %v211
    %404 = vmatprep.subr.mxu0 %v216
    %405 = vmatpush1.msra.mxu0 %v215
    %406 = vmatprep.subr.mxu0 %v220
    %407 = vmatpush1.msra.mxu0 %v219
    %408 = vmatprep.subr.mxu0 %v224
    %409 = vmatpush1.msra.mxu0 %v223
    %410 = vmatprep.subr.mxu0 %v228
    %411 = vmatpush1.msra.mxu0 %v227
    %412 = vmatprep.subr.mxu0 %v232
    %413 = vmatpush1.msra.mxu0 %v231
    %414 = vmatprep.subr.mxu0 %v236
    %415 = vmatpush1.msra.mxu0 %v235
    %416 = vmatprep.subr.mxu0 %v240
    %417 = vmatpush1.msra.mxu0 %v239
    %418 = vmatprep.subr.mxu0 %v244
    %419 = vmatpush1.msra.mxu0 %v243
    %420 = vmatprep.subr.mxu0 %v248
    %421 = vmatpush1.msra.mxu0 %v247
    %422 = vmatprep.subr.mxu0 %v252
    %423 = vmatpush1.msra.mxu0 %v251
    %424 = vmatprep.subr.mxu0 %v256
    %425 = vmatpush1.msra.mxu0 %v255
    %426 = vmatprep.subr.mxu0 0.0
    %427 = vmatpush1.msra.mxu0 0.0
    %428 = vmatprep.subr.mxu0 0.0
    %429 = vmatpush1.msra.mxu0 0.0
    %430 = vmatprep.subr.mxu0 0.0
    %431 = vmatpush1.msra.mxu0 0.0
    %432 = vmatprep.subr.mxu0 0.0
    %433 = vmatpush1.msra.mxu0 0.0
    %434 = vmatprep.subr.mxu0 0.0
    %435 = vmatpush1.msra.mxu0 0.0
    %436 = vmatprep.subr.mxu0 0.0
    %437 = vmatpush1.msra.mxu0 0.0
    %438 = vmatprep.subr.mxu0 0.0
    %439 = vmatpush1.msra.mxu0 0.0
    %440 = vmatprep.subr.mxu0 0.0
    %441 = vmatpush1.msra.mxu0 0.0
    %442 = vmatprep.subr.mxu0 0.0
    %443 = vmatpush1.msra.mxu0 0.0
    %444 = vmatprep.subr.mxu0 0.0
    %445 = vmatpush1.msra.mxu0 0.0
    %446 = vmatprep.subr.mxu0 0.0
    %447 = vmatpush1.msra.mxu0 0.0
    %448 = vmatprep.subr.mxu0 0.0
    %449 = vmatpush1.msra.mxu0 0.0
    %450 = vmatprep.subr.mxu0 0.0
    %451 = vmatpush1.msra.mxu0 0.0
    %452 = vmatprep.subr.mxu0 0.0
    %453 = vmatpush1.msra.mxu0 0.0
    %454 = vmatprep.subr.mxu0 0.0
    %455 = vmatpush1.msra.mxu0 0.0
    %456 = vmatprep.subr.mxu0 0.0
    %457 = vmatpush1.msra.mxu0 0.0
    %458 = vmatprep.mubr.f32.mxu0 0.0
    %459 = vmatmul.mubr.f32.gmra.mrb[0].mxu0 %v45
    %v460 = vpop.f32.mrb[0].mxu0
    %v461 = vadd.f32 %v348, %v460
    %v462 = vpop.f32.mrb[0].mxu0
    %v463 = vadd.f32 %v350, %v462
    %464 = vmatprep.mubr.f32.mxu0 0.0
    %465 = vmatmul.mubr.f32.gmra.mrb[0].mxu0 %v48
    %v466 = vpop.f32.mrb[0].mxu0
    %v467 = vadd.f32 %v354, %v466
    %v468 = vpop.f32.mrb[0].mxu0
    %v469 = vadd.f32 %v356, %v468
    %470 = vmatprep.mubr.f32.mxu0 0.0
    %471 = vmatmul.mubr.f32.gmra.mrb[0].mxu0 %v51
    %v472 = vpop.f32.mrb[0].mxu0
    %v473 = vadd.f32 %v360, %v472
    %v474 = vpop.f32.mrb[0].mxu0
    %v475 = vadd.f32 %v362, %v474
    %476 = vmatprep.mubr.f32.mxu0 0.0
    %477 = vmatmul.mubr.f32.gmra.mrb[0].mxu0 %v54
    %v478 = vpop.f32.mrb[0].mxu0
    %v479 = vadd.f32 %v366, %v478
    %v480 = vpop.f32.mrb[0].mxu0
    %v481 = vadd.f32 %v368, %v480
    %482 = vmatprep.mubr.f32.mxu0 0.0
    %483 = vmatmul.mubr.f32.gmra.mrb[0].mxu0 %v57
    %v484 = vpop.f32.mrb[0].mxu0
    %v485 = vadd.f32 %v372, %v484
    %v486 = vpop.f32.mrb[0].mxu0
    %v487 = vadd.f32 %v374, %v486
    %488 = vmatprep.mubr.f32.mxu0 0.0
    %489 = vmatmul.mubr.f32.gmra.mrb[0].mxu0 %v60
    %v490 = vpop.f32.mrb[0].mxu0
    %v491 = vadd.f32 %v378, %v490
    %v492 = vpop.f32.mrb[0].mxu0
    %v493 = vadd.f32 %v380, %v492
    %494 = vmatprep.mubr.f32.mxu0 0.0
    %495 = vmatmul.mubr.f32.gmra.mrb[0].mxu0 %v63
    %v496 = vpop.f32.mrb[0].mxu0
    %v497 = vadd.f32 %v384, %v496
    %v498 = vpop.f32.mrb[0].mxu0
    %v499 = vadd.f32 %v386, %v498
    %500 = vmatprep.mubr.f32.mxu0 0.0
    %501 = vmatmul.mubr.f32.gmra.mrb[0].mxu0 %v66
    %v502 = vpop.f32.mrb[0].mxu0
    %v503 = vadd.f32 %v390, %v502
    %v504 = vpop.f32.mrb[0].mxu0
    %v505 = vadd.f32 %v392, %v504
    %506 = vdwg.mxu0
    %507 = vmatprep.subr.mxu0 %v70
    %508 = vmatpush1.msra.mxu0 %v69
    %509 = vmatprep.subr.mxu0 %v74
    %510 = vmatpush1.msra.mxu0 %v73
    %511 = vmatprep.subr.mxu0 %v78
    %512 = vmatpush1.msra.mxu0 %v77
    %513 = vmatprep.subr.mxu0 %v82
    %514 = vmatpush1.msra.mxu0 %v81
    %515 = vmatprep.subr.mxu0 %v86
    %516 = vmatpush1.msra.mxu0 %v85
    %517 = vmatprep.subr.mxu0 %v90
    %518 = vmatpush1.msra.mxu0 %v89
    %519 = vmatprep.subr.mxu0 %v94
    %520 = vmatpush1.msra.mxu0 %v93
    %521 = vmatprep.subr.mxu0 %v98
    %522 = vmatpush1.msra.mxu0 %v97
    %523 = vmatprep.subr.mxu0 %v102
    %524 = vmatpush1.msra.mxu0 %v101
    %525 = vmatprep.subr.mxu0 %v106
    %526 = vmatpush1.msra.mxu0 %v105
    %527 = vmatprep.subr.mxu0 %v110
    %528 = vmatpush1.msra.mxu0 %v109
    %529 = vmatprep.subr.mxu0 %v114
    %530 = vmatpush1.msra.mxu0 %v113
    %531 = vmatprep.subr.mxu0 %v118
    %532 = vmatpush1.msra.mxu0 %v117
    %533 = vmatprep.subr.mxu0 %v122
    %534 = vmatpush1.msra.mxu0 %v121
    %535 = vmatprep.subr.mxu0 %v126
    %536 = vmatpush1.msra.mxu0 %v125
    %537 = vmatprep.subr.mxu0 %v130
    %538 = vmatpush1.msra.mxu0 %v129
    %539 = vmatprep.subr.mxu0 %v134
    %540 = vmatpush1.msra.mxu0 %v133
    %541 = vmatprep.subr.mxu0 %v138
    %542 = vmatpush1.msra.mxu0 %v137
    %543 = vmatprep.subr.mxu0 %v142
    %544 = vmatpush1.msra.mxu0 %v141
    %545 = vmatprep.subr.mxu0 %v146
    %546 = vmatpush1.msra.mxu0 %v145
    %547 = vmatprep.subr.mxu0 %v150
    %548 = vmatpush1.msra.mxu0 %v149
    %549 = vmatprep.subr.mxu0 %v154
    %550 = vmatpush1.msra.mxu0 %v153
    %551 = vmatprep.subr.mxu0 %v158
    %552 = vmatpush1.msra.mxu0 %v157
    %553 = vmatprep.subr.mxu0 %v162
    %554 = vmatpush1.msra.mxu0 %v161
    %555 = vmatprep.subr.mxu0 %v166
    %556 = vmatpush1.msra.mxu0 %v165
    %557 = vmatprep.subr.mxu0 %v170
    %558 = vmatpush1.msra.mxu0 %v169
    %559 = vmatprep.subr.mxu0 %v174
    %560 = vmatpush1.msra.mxu0 %v173
    %561 = vmatprep.subr.mxu0 %v178
    %562 = vmatpush1.msra.mxu0 %v177
    %563 = vmatprep.subr.mxu0 %v182
    %564 = vmatpush1.msra.mxu0 %v181
    %565 = vmatprep.subr.mxu0 %v186
    %566 = vmatpush1.msra.mxu0 %v185
    %567 = vmatprep.subr.mxu0 %v190
    %568 = vmatpush1.msra.mxu0 %v189
    %569 = vmatprep.subr.mxu0 %v194
    %570 = vmatpush1.msra.mxu0 %v193
    %571 = vmatprep.mubr.f32.mxu0 %v44
    %572 = vmatmul.mubr.f32.gmra.mrb[0].mxu0 %v43
    %v573 = vpop.f32.mrb[0].mxu0
    %v574 = vadd.f32 %v272, %v573
    %v575 = vpop.f32.mrb[0].mxu0
    %v576 = vadd.f32 %v276, %v575
    %577 = vmatprep.mubr.f32.mxu0 %v47
    %578 = vmatmul.mubr.f32.gmra.mrb[0].mxu0 %v46
    %v579 = vpop.f32.mrb[0].mxu0
    %v580 = vadd.f32 %v272, %v579
    %v581 = vpop.f32.mrb[0].mxu0
    %v582 = vadd.f32 %v276, %v581
    %583 = vmatprep.mubr.f32.mxu0 %v50
    %584 = vmatmul.mubr.f32.gmra.mrb[0].mxu0 %v49
    %v585 = vpop.f32.mrb[0].mxu0
    %v586 = vadd.f32 %v272, %v585
    %v587 = vpop.f32.mrb[0].mxu0
    %v588 = vadd.f32 %v276, %v587
    %589 = vmatprep.mubr.f32.mxu0 %v53
    %590 = vmatmul.mubr.f32.gmra.mrb[0].mxu0 %v52
    %v591 = vpop.f32.mrb[0].mxu0
    %v592 = vadd.f32 %v272, %v591
    %v593 = vpop.f32.mrb[0].mxu0
    %v594 = vadd.f32 %v276, %v593
    %595 = vmatprep.mubr.f32.mxu0 %v56
    %596 = vmatmul.mubr.f32.gmra.mrb[0].mxu0 %v55
    %v597 = vpop.f32.mrb[0].mxu0
    %v598 = vadd.f32 %v272, %v597
    %v599 = vpop.f32.mrb[0].mxu0
    %v600 = vadd.f32 %v276, %v599
    %601 = vmatprep.mubr.f32.mxu0 %v59
    %602 = vmatmul.mubr.f32.gmra.mrb[0].mxu0 %v58
    %v603 = vpop.f32.mrb[0].mxu0
    %v604 = vadd.f32 %v272, %v603
    %v605 = vpop.f32.mrb[0].mxu0
    %v606 = vadd.f32 %v276, %v605
    %607 = vmatprep.mubr.f32.mxu0 %v62
    %608 = vmatmul.mubr.f32.gmra.mrb[0].mxu0 %v61
    %v609 = vpop.f32.mrb[0].mxu0
    %v610 = vadd.f32 %v272, %v609
    %v611 = vpop.f32.mrb[0].mxu0
    %v612 = vadd.f32 %v276, %v611
    %613 = vmatprep.mubr.f32.mxu0 %v65
    %614 = vmatmul.mubr.f32.gmra.mrb[0].mxu0 %v64
    %v615 = vpop.f32.mrb[0].mxu0
    %v616 = vadd.f32 %v272, %v615
    %v617 = vpop.f32.mrb[0].mxu0
    %v618 = vadd.f32 %v276, %v617
    %619 = vdwg.mxu0
    %620 = vmatprep.subr.mxu0 %v198
    %621 = vmatpush1.msra.mxu0 %v197
    %622 = vmatprep.subr.mxu0 %v202
    %623 = vmatpush1.msra.mxu0 %v201
    %624 = vmatprep.subr.mxu0 %v206
    %625 = vmatpush1.msra.mxu0 %v205
    %626 = vmatprep.subr.mxu0 %v210
    %627 = vmatpush1.msra.mxu0 %v209
    %628 = vmatprep.subr.mxu0 %v214
    %629 = vmatpush1.msra.mxu0 %v213
    %630 = vmatprep.subr.mxu0 %v218
    %631 = vmatpush1.msra.mxu0 %v217
    %632 = vmatprep.subr.mxu0 %v222
    %633 = vmatpush1.msra.mxu0 %v221
    %634 = vmatprep.subr.mxu0 %v226
    %635 = vmatpush1.msra.mxu0 %v225
    %636 = vmatprep.subr.mxu0 %v230
    %637 = vmatpush1.msra.mxu0 %v229
    %638 = vmatprep.subr.mxu0 %v234
    %639 = vmatpush1.msra.mxu0 %v233
    %640 = vmatprep.subr.mxu0 %v238
    %641 = vmatpush1.msra.mxu0 %v237
    %642 = vmatprep.subr.mxu0 %v242
    %643 = vmatpush1.msra.mxu0 %v241
    %644 = vmatprep.subr.mxu0 %v246
    %645 = vmatpush1.msra.mxu0 %v245
    %646 = vmatprep.subr.mxu0 %v250
    %647 = vmatpush1.msra.mxu0 %v249
    %648 = vmatprep.subr.mxu0 %v254
    %649 = vmatpush1.msra.mxu0 %v253
    %650 = vmatprep.subr.mxu0 %v258
    %651 = vmatpush1.msra.mxu0 %v257
    %652 = vmatprep.subr.mxu0 0.0
    %653 = vmatpush1.msra.mxu0 0.0
    %654 = vmatprep.subr.mxu0 0.0
    %655 = vmatpush1.msra.mxu0 0.0
    %656 = vmatprep.subr.mxu0 0.0
    %657 = vmatpush1.msra.mxu0 0.0
    %658 = vmatprep.subr.mxu0 0.0
    %659 = vmatpush1.msra.mxu0 0.0
    %660 = vmatprep.subr.mxu0 0.0
    %661 = vmatpush1.msra.mxu0 0.0
    %662 = vmatprep.subr.mxu0 0.0
    %663 = vmatpush1.msra.mxu0 0.0
    %664 = vmatprep.subr.mxu0 0.0
    %665 = vmatpush1.msra.mxu0 0.0
    %666 = vmatprep.subr.mxu0 0.0
    %667 = vmatpush1.msra.mxu0 0.0
    %668 = vmatprep.subr.mxu0 0.0
    %669 = vmatpush1.msra.mxu0 0.0
    %670 = vmatprep.subr.mxu0 0.0
    %671 = vmatpush1.msra.mxu0 0.0
    %672 = vmatprep.subr.mxu0 0.0
    %673 = vmatpush1.msra.mxu0 0.0
    %674 = vmatprep.subr.mxu0 0.0
    %675 = vmatpush1.msra.mxu0 0.0
    %676 = vmatprep.subr.mxu0 0.0
    %677 = vmatpush1.msra.mxu0 0.0
    %678 = vmatprep.subr.mxu0 0.0
    %679 = vmatpush1.msra.mxu0 0.0
    %680 = vmatprep.subr.mxu0 0.0
    %681 = vmatpush1.msra.mxu0 0.0
    %682 = vmatprep.subr.mxu0 0.0
    %683 = vmatpush1.msra.mxu0 0.0
    %684 = vmatprep.mubr.f32.mxu0 0.0
    %685 = vmatmul.mubr.f32.gmra.mrb[0].mxu0 %v45
    %v686 = vpop.f32.mrb[0].mxu0
    %v687 = vadd.f32 %v574, %v686
    %v688 = vpop.f32.mrb[0].mxu0
    %v689 = vadd.f32 %v576, %v688
    %690 = vmatprep.mubr.f32.mxu0 0.0
    %691 = vmatmul.mubr.f32.gmra.mrb[0].mxu0 %v48
    %v692 = vpop.f32.mrb[0].mxu0
    %v693 = vadd.f32 %v580, %v692
    %v694 = vpop.f32.mrb[0].mxu0
    %v695 = vadd.f32 %v582, %v694
    %696 = vmatprep.mubr.f32.mxu0 0.0
    %697 = vmatmul.mubr.f32.gmra.mrb[0].mxu0 %v51
    %v698 = vpop.f32.mrb[0].mxu0
    %v699 = vadd.f32 %v586, %v698
    %v700 = vpop.f32.mrb[0].mxu0
    %v701 = vadd.f32 %v588, %v700
    %702 = vmatprep.mubr.f32.mxu0 0.0
    %703 = vmatmul.mubr.f32.gmra.mrb[0].mxu0 %v54
    %v704 = vpop.f32.mrb[0].mxu0
    %v705 = vadd.f32 %v592, %v704
    %v706 = vpop.f32.mrb[0].mxu0
    %v707 = vadd.f32 %v594, %v706
    %708 = vmatprep.mubr.f32.mxu0 0.0
    %709 = vmatmul.mubr.f32.gmra.mrb[0].mxu0 %v57
    %v710 = vpop.f32.mrb[0].mxu0
    %v711 = vadd.f32 %v598, %v710
    %v712 = vpop.f32.mrb[0].mxu0
    %v713 = vadd.f32 %v600, %v712
    %714 = vmatprep.mubr.f32.mxu0 0.0
    %715 = vmatmul.mubr.f32.gmra.mrb[0].mxu0 %v60
    %v716 = vpop.f32.mrb[0].mxu0
    %v717 = vadd.f32 %v604, %v716
    %v718 = vpop.f32.mrb[0].mxu0
    %v719 = vadd.f32 %v606, %v718
    %720 = vmatprep.mubr.f32.mxu0 0.0
    %721 = vmatmul.mubr.f32.gmra.mrb[0].mxu0 %v63
    %v722 = vpop.f32.mrb[0].mxu0
    %v723 = vadd.f32 %v610, %v722
    %v724 = vpop.f32.mrb[0].mxu0
    %v725 = vadd.f32 %v612, %v724
    %726 = vmatprep.mubr.f32.mxu0 0.0
    %727 = vmatmul.mubr.f32.gmra.mrb[0].mxu0 %v66
    %v728 = vpop.f32.mrb[0].mxu0
    %v729 = vadd.f32 %v616, %v728
    %v730 = vpop.f32.mrb[0].mxu0
    %v731 = vadd.f32 %v618, %v730
    %732 = vdwg.mxu0
    %733 = vst [vmem:[#allocation7] sm:$0xff] %v461
    %734 = vst [vmem:[#allocation7 + $0x8] sm:$0xff] %v463
    %735 = vst [vmem:[#allocation7 + $0x10] sm:$0xff] %v687
    %736 = vst [vmem:[#allocation7 + $0x18] sm:$0xff] %v689
    %737 = vst [vmem:[#allocation7 + $0x20] sm:$0xff] %v467
    %738 = vst [vmem:[#allocation7 + $0x28] sm:$0xff] %v469
    %739 = vst [vmem:[#allocation7 + $0x30] sm:$0xff] %v693
    %740 = vst [vmem:[#allocation7 + $0x38] sm:$0xff] %v695
    %741 = vst [vmem:[#allocation7 + $0x40] sm:$0xff] %v473
    %742 = vst [vmem:[#allocation7 + $0x48] sm:$0xff] %v475
    %743 = vst [vmem:[#allocation7 + $0x50] sm:$0xff] %v699
    %744 = vst [vmem:[#allocation7 + $0x58] sm:$0xff] %v701
    %745 = vst [vmem:[#allocation7 + $0x60] sm:$0xff] %v479
    %746 = vst [vmem:[#allocation7 + $0x68] sm:$0xff] %v481
    %747 = vst [vmem:[#allocation7 + $0x70] sm:$0xff] %v705
    %748 = vst [vmem:[#allocation7 + $0x78] sm:$0xff] %v707
    %749 = vst [vmem:[#allocation7 + $0x80] sm:$0xff] %v485
    %750 = vst [vmem:[#allocation7 + $0x88] sm:$0xff] %v487
    %751 = vst [vmem:[#allocation7 + $0x90] sm:$0xff] %v711
    %752 = vst [vmem:[#allocation7 + $0x98] sm:$0xff] %v713
    %753 = vst [vmem:[#allocation7 + $0xa0] sm:$0xff] %v491
    %754 = vst [vmem:[#allocation7 + $0xa8] sm:$0xff] %v493
    %755 = vst [vmem:[#allocation7 + $0xb0] sm:$0xff] %v717
    %756 = vst [vmem:[#allocation7 + $0xb8] sm:$0xff] %v719
    %757 = vst [vmem:[#allocation7 + $0xc0] sm:$0xff] %v497
    %758 = vst [vmem:[#allocation7 + $0xc8] sm:$0xff] %v499
    %759 = vst [vmem:[#allocation7 + $0xd0] sm:$0xff] %v723
    %760 = vst [vmem:[#allocation7 + $0xd8] sm:$0xff] %v725
    %761 = vst [vmem:[#allocation7 + $0xe0] sm:$0xff] %v503
    %762 = vst [vmem:[#allocation7 + $0xe8] sm:$0xff] %v505
    %763 = vst [vmem:[#allocation7 + $0xf0] sm:$0xff] %v729
    %764 = vst [vmem:[#allocation7 + $0xf8] sm:$0xff] %v731
    // Predicated region
    $region22: #{tpu_custom_call.1} parent=1 // pred_check
      _
    $region23: #{tpu_custom_call.1} parent=1 // pred_check_branch
      %766 = sbr.rel (0) target = $region25
    $region24: #{tpu_custom_call.1} parent=1 // pred_region
      %s768 = ssub.s32 4096, 4096
      %769 = vsyncadd [#allocation4], %s768
      %s770 = sshll.u32 [#allocation7], 4
      %s771 = int_to_ptr.vmem [resolvable:$true] %s770
      %776 = dma.vmem_to_hbm [thread:$0]  %s771, 4096, %s3, [#allocation4], 512, 512, 32
    $region25: #{tpu_custom_call.1} parent=1 // pred_fallthru
      _
    // Predicated region
    $region26: #{tpu_custom_call.1} parent=1 // pred_check
      _
    $region27: #{tpu_custom_call.1} parent=1 // pred_check_branch
      %778 = sbr.rel (0) target = $region29
    $region28: #{tpu_custom_call.1} parent=1 // pred_region
      %779 = dma.done [#allocation4], 4096
    $region29: #{tpu_custom_call.1} parent=1 // pred_fallthru
      _
    %780 = vsyncpa [#allocation3], 1
    %781 = vsyncpa [#allocation6], 1
    %782 = vsyncpa [#allocation4], 1

</llo_original>
